<compile_context>
chip_gen: v6e
topology: v6e:2x2x1
jax: 0.10.0
libtpu: 0.0.40
codegen_flags: <defaults>
</compile_context>

<pallas_src>
import functools

import jax
import jax.numpy as jnp
from jax import lax
from jax.experimental import pallas as pl
from jax.experimental.pallas import tpu as pltpu


# ----------------------------- kernels --------------------------------------
def _downsample_conv_kernel(x_ref, w_ref, b_ref, o_ref):
    """One (sample, row-tile) step of the stride-2 3x3 conv.

    x_ref : (1, 1, (TH+1)*Wout, 8*Cin) bf16  dx-packed space-to-depth rows,
            (row, col) flattened onto the sublane axis, 1-row halo at the end.
    w_ref : (2, 8*Cin, Cout) bf16            taps indexed by dy.
    b_ref : (1, Cout) f32
    o_ref : (1, 1, TH*Wout, Cout)
    """
    m = o_ref.shape[2]               # TH * Wout
    wout = x_ref.shape[2] - m        # flat-row offset of the dy=1 view
    xf = x_ref[0, 0]                 # ((TH+1)*Wout, 8*Cin), single load

    acc = jnp.dot(xf[0:m], w_ref[0], preferred_element_type=jnp.float32)
    acc = acc + jnp.dot(xf[wout:wout + m], w_ref[1],
                        preferred_element_type=jnp.float32)
    # bias + cast fused into the single epilogue pass / store
    o_ref[0, 0] = (acc + b_ref[...]).astype(o_ref.dtype)


def _downsample_pool_kernel(x_ref, o_ref):
    """2x2 / stride-2 average pool on one (sample, row-tile) block.

    x_ref : (1, TH, 2, Wout, 2*C)  raw NHWC rows, 2x2 blocks exposed by a free
                                   wrapper reshape (no data movement).
    o_ref : (1, TH, Wout, C)
    """
    c = o_ref.shape[3]
    x = x_ref[0]                                   # (TH, 2, Wout, 2C)
    s = x[:, 0] + x[:, 1]                          # vertical pair sum (VPU)
    o_ref[0] = (0.25 * (s[:, :, :c] + s[:, :, c:])).astype(o_ref.dtype)


# ----------------------------- helpers ---------------------------------------
def _pick_row_tile(hout, per_row_bytes, budget=2 << 20):
    """Largest row tile whose working set stays within ~`budget` bytes."""
    return int(max(1, min(hout, budget // max(per_row_bytes, 1))))


def _vmem_limit(block_bytes):
    # double-buffered blocks + temporaries + headroom, capped well below the
    # v7x 64 MiB physical VMEM (per review: never clamp to the full 64 MiB).
    return int(min(40 << 20, max(block_bytes + (4 << 20), 16 << 20)))


# ----------------------------- forward ---------------------------------------
@functools.partial(jax.jit,
                   static_argnames=("with_conv", "row_tile", "out_dtype"))
def downsample_forward(x_nchw, params, with_conv, row_tile=None,
                       out_dtype=jnp.float32):
    """Forward pass of Downsample.  x_nchw: (N, C, H, W), PyTorch layout."""
    n, c, h, w = x_nchw.shape
    hout, wout = h // 2, w // 2                       # == PyTorch output size
    x = jnp.transpose(x_nchw, (0, 2, 3, 1))           # NHWC (see TODO above)

    if with_conv:
        cw, cb = params["conv_w"], params["conv_b"]   # OIHW (Cout,Cin,3,3), (Cout,)
        cout = cw.shape[0]
        out_isz = jnp.dtype(out_dtype).itemsize

        # ---- row tile size from a VMEM budget (in + out double-buffered + acc)
        per_row = wout * (8 * c * 2 * 3 + cout * (2 * out_isz + 4))
        th = int(row_tile) if row_tile is not None else _pick_row_tile(hout, per_row)
        t = -(-hout // th)                            # number of row tiles
        hp = t * th + 1                               # s2d rows incl. halo/pad
        wp = wout + 1

        # ---- space-to-depth with the conv's (0,1,0,1) zero pad folded in.
        # Extra pad rows/cols either are the conv's own zero pad (odd H/W) or
        # only ever hit zero-weight taps, so results are unchanged.
        xp = jnp.pad(x, ((0, 0), (0, 2 * hp - h), (0, 2 * wp - w), (0, 0)))
        # s2d4[n, I, J, (r*2+q)*C + ch] = xp[n, 2I+r, 2J+q, ch]
        s2d4 = (xp.reshape(n, hp, 2, wp, 2, c)
                  .transpose(0, 1, 3, 2, 4, 5)
                  .reshape(n, hp, wp, 4 * c))
        # pack the dx column parity into channels -> last dim 8*C, width = Wout
        s2d8 = jnp.concatenate([s2d4[:, :, :wout, :], s2d4[:, :, 1:wout + 1, :]],
                               axis=-1).astype(jnp.bfloat16)
        # row-tile with a wrapper-duplicated 1-row halo, then flatten (row, col)
        # onto the sublane axis so the kernel needs no reshape at all.
        if t == 1:
            s2d_t = s2d8[:, None]
        else:
            idx = th * jnp.arange(t)[:, None] + jnp.arange(th + 1)[None, :]
            s2d_t = jnp.take(s2d8, idx, axis=1)       # (N, T, TH+1, Wout, 8C)
        s2d_t = s2d_t.reshape(n, t, (th + 1) * wout, 8 * c)

        # ---- weights: w8[dy, dx*4C + (r*2+q)*C + ci, o] = w[o, ci, 2dy+r, 2dx+q]
        wt = jnp.transpose(cw, (2, 3, 1, 0))                       # (3,3,Cin,Cout)
        wt = jnp.pad(wt, ((0, 1), (0, 1), (0, 0), (0, 0)))         # (4,4,Cin,Cout)
        w8 = (wt.reshape(2, 2, 2, 2, c, cout)
                .transpose(0, 2, 1, 3, 4, 5)
                .reshape(2, 8 * c, cout)
                .astype(jnp.bfloat16))
        b2 = cb.reshape(1, cout).astype(jnp.float32)

        in_block = (th + 1) * wout * 8 * c * 2
        out_block = th * wout * cout * out_isz
        w_bytes = 2 * 8 * c * cout * 2 + cout * 4
        acc_bytes = th * wout * cout * 4
        vmem = _vmem_limit(3 * in_block + 2 * out_block + 2 * w_bytes + acc_bytes)

        out_t = pl.pallas_call(
            _downsample_conv_kernel,
            out_shape=jax.ShapeDtypeStruct((n, t, th * wout, cout), out_dtype),
            grid_spec=pltpu.PrefetchScalarGridSpec(
                num_scalar_prefetch=0,
                grid=(n, t),
                in_specs=[
                    pl.BlockSpec((1, 1, (th + 1) * wout, 8 * c),
                                 lambda ni, ti: (ni, ti, 0, 0)),
                    pl.BlockSpec((2, 8 * c, cout), lambda ni, ti: (0, 0, 0)),
                    pl.BlockSpec((1, cout), lambda ni, ti: (0, 0)),
                ],
                out_specs=pl.BlockSpec((1, 1, th * wout, cout),
                                       lambda ni, ti: (ni, ti, 0, 0)),
            ),
            compiler_params=pltpu.CompilerParams(
                dimension_semantics=("parallel", "parallel"),
                vmem_limit_bytes=vmem,
            ),
        )(s2d_t, w8, b2)
        out = out_t.reshape(n, t * th, wout, cout)[:, :hout]
    else:
        # avg_pool2d(2, 2): kernel consumes the raw NHWC rows; the 2x2 block
        # structure is exposed with a free (layout-compatible) reshape.
        x2 = x[:, :2 * hout, :2 * wout, :] if (h % 2 or w % 2) else x
        th = int(row_tile) if row_tile is not None else max(1, min(hout, 128))
        t = -(-hout // th)
        if t * th != hout:
            x2 = jnp.pad(x2, ((0, 0), (0, 2 * (t * th - hout)), (0, 0), (0, 0)))
        x2 = x2.reshape(n, t * th, 2, wout, 2 * c)     # free reshape, no HBM pass

        in_block = th * 2 * wout * 2 * c * 4
        out_block = th * wout * c * 4
        vmem = _vmem_limit(3 * in_block + 2 * out_block)

        out_t = pl.pallas_call(
            _downsample_pool_kernel,
            out_shape=jax.ShapeDtypeStruct((n, t * th, wout, c), x_nchw.dtype),
            grid_spec=pltpu.PrefetchScalarGridSpec(
                num_scalar_prefetch=0,
                grid=(n, t),
                in_specs=[pl.BlockSpec((1, th, 2, wout, 2 * c),
                                       lambda ni, ti: (ni, ti, 0, 0, 0))],
                out_specs=pl.BlockSpec((1, th, wout, c),
                                       lambda ni, ti: (ni, ti, 0, 0)),
            ),
            compiler_params=pltpu.CompilerParams(
                dimension_semantics=("parallel", "parallel"),
                vmem_limit_bytes=vmem,
            ),
        )(x2)
        out = out_t[:, :hout]

    return jnp.transpose(out, (0, 3, 1, 2))            # back to NCHW


# ---------------- pure-JAX reference (for correctness check) -----------------
def ref_downsample(x_nchw, params, with_conv):
    if with_conv:
        xp = jnp.pad(x_nchw, ((0, 0), (0, 0), (0, 1), (0, 1)))   # pad=(0,1,0,1)
        y = lax.conv_general_dilated(
            xp, params["conv_w"], window_strides=(2, 2), padding="VALID",
            dimension_numbers=("NCHW", "OIHW", "NCHW"))
        return y + params["conv_b"][None, :, None, None]
    n, c, h, w = x_nchw.shape
    ho, wo = h // 2, w // 2
    return x_nchw[:, :, :2 * ho, :2 * wo].reshape(n, c, ho, 2, wo, 2).mean(axis=(3, 5))


if __name__ == "__main__":
    key = jax.random.PRNGKey(0)
    N, C, H, W = 2, 4, 16, 16
    k1, k2, k3 = jax.random.split(key, 3)
    x = jax.random.normal(k1, (N, C, H, W), jnp.float32)
    params = {
        "conv_w": 0.2 * jax.random.normal(k2, (C, C, 3, 3), jnp.float32),
        "conv_b": 0.1 * jax.random.normal(k3, (C,), jnp.float32),
    }

    # with_conv=True (strided conv), default row tiling
    y = jax.block_until_ready(downsample_forward(x, params, with_conv=True))
    y_ref = ref_downsample(x, params, True)
    assert y.shape == (N, C, H // 2, W // 2), y.shape
    assert jnp.allclose(y, y_ref, atol=3e-2, rtol=3e-2), \
        float(jnp.max(jnp.abs(y - y_ref)))

    # with_conv=True, forced multi-tile grid (non-dividing row tile -> pad path)
    y2 = jax.block_until_ready(downsample_forward(x, params, with_conv=True,
                                                  row_tile=3))
    assert jnp.allclose(y2, y_ref, atol=3e-2, rtol=3e-2), \
        float(jnp.max(jnp.abs(y2 - y_ref)))

    # with_conv=False (avg pool)
    p = jax.block_until_ready(downsample_forward(x, params, with_conv=False))
    p_ref = ref_downsample(x, params, False)
    assert p.shape == (N, C, H // 2, W // 2), p.shape
    assert jnp.allclose(p, p_ref, atol=1e-5, rtol=1e-5), \
        float(jnp.max(jnp.abs(p - p_ref)))

    # odd spatial sizes (PyTorch semantics: out = floor(H/2) x floor(W/2))
    x_odd = jax.random.normal(k1, (1, C, 9, 11), jnp.float32)
    yo = jax.block_until_ready(downsample_forward(x_odd, params, with_conv=True))
    yo_ref = ref_downsample(x_odd, params, True)
    assert yo.shape == yo_ref.shape == (1, C, 4, 5), (yo.shape, yo_ref.shape)
    assert jnp.allclose(yo, yo_ref, atol=3e-2, rtol=3e-2), \
        float(jnp.max(jnp.abs(yo - yo_ref)))
    po = jax.block_until_ready(downsample_forward(x_odd, params, with_conv=False))
    po_ref = ref_downsample(x_odd, params, False)
    assert jnp.allclose(po, po_ref, atol=1e-5, rtol=1e-5), \
        float(jnp.max(jnp.abs(po - po_ref)))

    print("KERNEL_OK")
</pallas_src>

<mosaic_0001>
module attributes {stable_mosaic.version = 11 : i64} {
  func.func @_downsample_conv_kernel(%arg0: i32, %arg1: i32, %arg2: memref<1x1x72x32xbf16, #tpu.memory_space<vmem>>, %arg3: memref<2x32x4xbf16, #tpu.memory_space<vmem>>, %arg4: memref<1x4xf32, #tpu.memory_space<vmem>>, %arg5: memref<1x1x64x4xf32, #tpu.memory_space<vmem>>) attributes {dimension_semantics = [#tpu.dimension_semantics<parallel>, #tpu.dimension_semantics<parallel>], iteration_bounds = array<i64: 2, 1>, scalar_prefetch = 0 : i64, scratch_operands = 0 : i64, tpu.core_type = #tpu.core_type<tc>, window_params = [{transform_indices = @transform_0, window_bounds = array<i64: 1, 1, 72, 32>}, {pipeline_mode = #tpu.pipeline_mode<synchronous>, transform_indices = @transform_1, window_bounds = array<i64: 2, 32, 4>}, {pipeline_mode = #tpu.pipeline_mode<synchronous>, transform_indices = @transform_2, window_bounds = array<i64: 1, 4>}, {transform_indices = @transform_3, window_bounds = array<i64: 1, 1, 64, 4>}]} {
    %c0 = arith.constant 0 : index
    %c0_0 = arith.constant 0 : index
    %c0_1 = arith.constant 0 : index
    %c0_2 = arith.constant 0 : index
    %0 = vector.load %arg2[%c0, %c0_0, %c0_1, %c0_2] : memref<1x1x72x32xbf16, #tpu.memory_space<vmem>>, vector<1x1x72x32xbf16>
    %1 = vector.shape_cast %0 : vector<1x1x72x32xbf16> to vector<72x32xbf16>
    %2 = vector.extract_strided_slice %1 {offsets = [0, 0], sizes = [64, 32], strides = [1, 1]} : vector<72x32xbf16> to vector<64x32xbf16>
    %c0_3 = arith.constant 0 : index
    %c0_4 = arith.constant 0 : index
    %c0_5 = arith.constant 0 : index
    %3 = vector.load %arg3[%c0_3, %c0_4, %c0_5] : memref<2x32x4xbf16, #tpu.memory_space<vmem>>, vector<1x32x4xbf16>
    %4 = vector.shape_cast %3 : vector<1x32x4xbf16> to vector<32x4xbf16>
    %cst = arith.constant dense<0.000000e+00> : vector<64x4xf32>
    %5 = tpu.matmul %2, %4, %cst {dimension_numbers = #tpu.dot_dimension_numbers<[1], [0], [0], [1], [0, 0, 1, 1], [], []>} : vector<64x32xbf16>, vector<32x4xbf16>, vector<64x4xf32> -> vector<64x4xf32>
    %6 = vector.extract_strided_slice %1 {offsets = [8, 0], sizes = [64, 32], strides = [1, 1]} : vector<72x32xbf16> to vector<64x32xbf16>
    %c1 = arith.constant 1 : index
    %c0_6 = arith.constant 0 : index
    %c0_7 = arith.constant 0 : index
    %7 = vector.load %arg3[%c1, %c0_6, %c0_7] : memref<2x32x4xbf16, #tpu.memory_space<vmem>>, vector<1x32x4xbf16>
    %8 = vector.shape_cast %7 : vector<1x32x4xbf16> to vector<32x4xbf16>
    %cst_8 = arith.constant dense<0.000000e+00> : vector<64x4xf32>
    %9 = tpu.matmul %6, %8, %cst_8 {dimension_numbers = #tpu.dot_dimension_numbers<[1], [0], [0], [1], [0, 0, 1, 1], [], []>} : vector<64x32xbf16>, vector<32x4xbf16>, vector<64x4xf32> -> vector<64x4xf32>
    %10 = arith.addf %5, %9 : vector<64x4xf32>
    %c0_9 = arith.constant 0 : index
    %c0_10 = arith.constant 0 : index
    %11 = vector.load %arg4[%c0_9, %c0_10] : memref<1x4xf32, #tpu.memory_space<vmem>>, vector<1x4xf32>
    %12 = vector.broadcast %11 : vector<1x4xf32> to vector<64x4xf32>
    %13 = arith.addf %10, %12 : vector<64x4xf32>
    %c0_11 = arith.constant 0 : index
    %c0_12 = arith.constant 0 : index
    %c0_13 = arith.constant 0 : index
    %c0_14 = arith.constant 0 : index
    %14 = vector.load %arg5[%c0_11, %c0_12, %c0_13, %c0_14] : memref<1x1x64x4xf32, #tpu.memory_space<vmem>>, vector<1x1x64x4xf32>
    %15 = vector.shape_cast %14 : vector<1x1x64x4xf32> to vector<64x4xf32>
    %16 = vector.shape_cast %13 : vector<64x4xf32> to vector<1x1x64x4xf32>
    tpu.vector_store %arg5[%c0_11, %c0_12, %c0_13, %c0_14], %16 {strides = array<i32>} : memref<1x1x64x4xf32, #tpu.memory_space<vmem>>, vector<1x1x64x4xf32>,
    return
  }
  func.func @transform_0(%arg0: i32, %arg1: i32) -> (i32, i32, i32, i32) {
    %c0_i32 = arith.constant 0 : i32
    %c0_i32_0 = arith.constant 0 : i32
    %c0_i32_1 = arith.constant 0 : i32
    return %arg0, %arg1, %c0_i32, %c0_i32_0 : i32, i32, i32, i32
  }
  func.func @transform_1(%arg0: i32, %arg1: i32) -> (i32, i32, i32) {
    %c0_i32 = arith.constant 0 : i32
    %c0_i32_0 = arith.constant 0 : i32
    %c0_i32_1 = arith.constant 0 : i32
    %c0_i32_2 = arith.constant 0 : i32
    return %c0_i32, %c0_i32_0, %c0_i32_1 : i32, i32, i32
  }
  func.func @transform_2(%arg0: i32, %arg1: i32) -> (i32, i32) {
    %c0_i32 = arith.constant 0 : i32
    %c0_i32_0 = arith.constant 0 : i32
    %c0_i32_1 = arith.constant 0 : i32
    return %c0_i32, %c0_i32_0 : i32, i32
  }
  func.func @transform_3(%arg0: i32, %arg1: i32) -> (i32, i32, i32, i32) {
    %c0_i32 = arith.constant 0 : i32
    %c0_i32_0 = arith.constant 0 : i32
    %c0_i32_1 = arith.constant 0 : i32
    return %arg0, %arg1, %c0_i32, %c0_i32_0 : i32, i32, i32, i32
  }
}

</mosaic_0001>

<llo_original>
// kernel: downsample_forward.1
$region0: #{downsample_forward.1}
  #allocation0 [shape = 'u32[]', space=smem, size = 0x4, offset = 0x4, fixed_abs, tag = 'smem constant byte address 0x4 - core index']
  #allocation1 [shape = 'u32[144,128]{1,0:T(1,128)}', space=vmem, size = 0x12000, scoped, tag = 'internal scratch']
  %s0 = inlined_call_operand.vmem [shape: bf16[2,1,72,32], index: 0, kind: input, shape index: {}]
  %s1 = inlined_call_operand.vmem [shape: bf16[2,32,4], index: 1, kind: input, shape index: {}]
  %s2 = inlined_call_operand.vmem [shape: f32[1,4], index: 2, kind: input, shape index: {}]
  %s3 = inlined_call_operand.vmem [shape: f32[2,1,64,4], index: 3, kind: output, shape index: {}]
  %s4 = sld [smem:[#allocation0]]
  $region45: #{downsample_forward.1} parent=0
    _
  %s6 = ssub.s32 1, %s4
  %s7 = scalar_select 0, %s6, %s4
  loop: start=0, step=1, limit=4
  $region2: #{downsample_forward.1} parent=0 // loop_pre_header
    _
  $region3: #{downsample_forward.1} parent=0 // loop_header
    %s9 = sphi 0, %s13
    %p10 = scmp.ge.s32.totalorder %s9, 4
    %s16 = sphi 0, %s28
    %s17 = sphi 0, %s24
    %s18 = sphi 0, %s16
    %s19 = sphi 0, %s17
    %s20 = sphi 0, %s18
    %s21 = sphi 0, %s19
    %s33 = sphi 0, %s35
    %s36 = sphi 0, %s33
    %s37 = sphi 0, %s36
    %s53 = sphi 0, %s37
    %s57 = sphi 0, %s57
    %s59 = sphi 0, %s57
    %s60 = sphi 0, %s59
    %s74 = sphi 0, %s60
    %s78 = sphi 0, %s78
    %s80 = sphi 0, %s78
    %s81 = sphi 0, %s80
    %s95 = sphi 0, %s81
    %s103 = sphi 0, %s105
    %s106 = sphi 0, %s103
    %s107 = sphi 0, %s106
    %s123 = sphi 0, %s107
  $region4: #{downsample_forward.1} parent=0 // loop_header_branch
    %12 = sbr.rel (%p10) target = $region8
  $region5: #{downsample_forward.1} parent=0 // loop_body
    %s14 = ssub.s32 %s9, 1
    %s15 = ssub.s32 %s9, 2
    %s22 = sadd.s32 1, %s17
    %p23 = scmp.ge.s32.totalorder %s22, 1
    %s24 = scalar_select %p23, 0, %s22
    %s25 = sadd.s32 1, %s16
    %s26 = scalar_select %p23, %s25, %s16
    %p27 = scmp.ge.s32.totalorder %s26, 2
    %s28 = scalar_select %p27, 0, %s26
    %s29 = ssub.s32 %s16, %s28
    %s30 = ssub.s32 %s17, %s24
    %s31 = sor.u32 %s29, %s30
    %p32 = scmp.eq.s32.totalorder %s31, 0
    %s34 = sadd.s32 %s33, 1
    %s35 = scalar_select %p32, %s33, %s34
    %p38 = pneg %p32
    %p39 = scmp.eq.s32.totalorder %s9, 1
    %p40 = por %p38, %p39
    %p41 = scmp.ne.s32.totalorder %s33, %s36
    %p42 = scmp.eq.s32.totalorder %s9, 0
    %p43 = por %p41, %p42
    %p44 = scmp.ne.s32.totalorder %s33, %s36
    %p45 = scmp.eq.s32.totalorder %s14, 1
    %p46 = por %p44, %p45
    %p47 = scmp.ne.s32.totalorder %s36, %s37
    %p48 = scmp.eq.s32.totalorder %s14, 0
    %p49 = por %p47, %p48
    %p50 = scmp.ne.s32.totalorder %s36, %s37
    %p51 = scmp.eq.s32.totalorder %s15, 1
    %p52 = por %p50, %p51
    %p54 = scmp.ne.s32.totalorder %s37, %s53
    %p55 = scmp.eq.s32.totalorder %s15, 0
    %p56 = por %p54, %p55
    %s58 = sadd.s32 %s57, 1
    %p61 = scmp.eq.s32.totalorder %s9, 1
    %p62 = scmp.ne.s32.totalorder %s57, %s59
    %p63 = scmp.eq.s32.totalorder %s9, 0
    %p64 = por %p62, %p63
    %p65 = scmp.ne.s32.totalorder %s57, %s59
    %p66 = scmp.eq.s32.totalorder %s14, 1
    %p67 = por %p65, %p66
    %p68 = scmp.ne.s32.totalorder %s59, %s60
    %p69 = scmp.eq.s32.totalorder %s14, 0
    %p70 = por %p68, %p69
    %p71 = scmp.ne.s32.totalorder %s59, %s60
    %p72 = scmp.eq.s32.totalorder %s15, 1
    %p73 = por %p71, %p72
    %p75 = scmp.ne.s32.totalorder %s60, %s74
    %p76 = scmp.eq.s32.totalorder %s15, 0
    %p77 = por %p75, %p76
    %s79 = sadd.s32 %s78, 1
    %p82 = scmp.eq.s32.totalorder %s9, 1
    %p83 = scmp.ne.s32.totalorder %s78, %s80
    %p84 = scmp.eq.s32.totalorder %s9, 0
    %p85 = por %p83, %p84
    %p86 = scmp.ne.s32.totalorder %s78, %s80
    %p87 = scmp.eq.s32.totalorder %s14, 1
    %p88 = por %p86, %p87
    %p89 = scmp.ne.s32.totalorder %s80, %s81
    %p90 = scmp.eq.s32.totalorder %s14, 0
    %p91 = por %p89, %p90
    %p92 = scmp.ne.s32.totalorder %s80, %s81
    %p93 = scmp.eq.s32.totalorder %s15, 1
    %p94 = por %p92, %p93
    %p96 = scmp.ne.s32.totalorder %s81, %s95
    %p97 = scmp.eq.s32.totalorder %s15, 0
    %p98 = por %p96, %p97
    %s99 = ssub.s32 %s16, %s28
    %s100 = ssub.s32 %s17, %s24
    %s101 = sor.u32 %s99, %s100
    %p102 = scmp.eq.s32.totalorder %s101, 0
    %s104 = sadd.s32 %s103, 1
    %s105 = scalar_select %p102, %s103, %s104
    %p108 = pneg %p102
    %p109 = scmp.eq.s32.totalorder %s9, 1
    %p110 = por %p108, %p109
    %p111 = scmp.ne.s32.totalorder %s103, %s106
    %p112 = scmp.eq.s32.totalorder %s9, 0
    %p113 = por %p111, %p112
    %p114 = scmp.ne.s32.totalorder %s103, %s106
    %p115 = scmp.eq.s32.totalorder %s14, 1
    %p116 = por %p114, %p115
    %p117 = scmp.ne.s32.totalorder %s106, %s107
    %p118 = scmp.eq.s32.totalorder %s14, 0
    %p119 = por %p117, %p118
    %p120 = scmp.ne.s32.totalorder %s106, %s107
    %p121 = scmp.eq.s32.totalorder %s15, 1
    %p122 = por %p120, %p121
    %p124 = scmp.ne.s32.totalorder %s107, %s123
    %p125 = scmp.eq.s32.totalorder %s15, 0
    %p126 = por %p124, %p125
    %p127 = scmp.le.s32.totalorder 1, %s9
    %p128 = scmp.lt.s32.totalorder %s9, 3
    %p129 = pnand %p127, %p128
    %p130 = pneg %p129
    // Predicated region
    $region9: #{downsample_forward.1} parent=5 // pred_check
      _
    $region10: #{downsample_forward.1} parent=5 // pred_check_branch
      %132 = sbr.rel (%p129) target = $region12
    $region11: #{downsample_forward.1} parent=5 // pred_region
      %s133 = ssub.s32 %s9, 1
      // Predicated region
      $region13: #{downsample_forward.1} parent=11 // pred_check
        %p134 = pneg %p70
      $region14: #{downsample_forward.1} parent=11 // pred_check_branch
        %136 = sbr.rel (%p134) target = $region16
      $region15: #{downsample_forward.1} parent=11 // pred_region
        _
      $region16: #{downsample_forward.1} parent=11 // pred_fallthru
        _
      // Predicated region
      $region17: #{downsample_forward.1} parent=11 // pred_check
        %p137 = pneg %p91
      $region18: #{downsample_forward.1} parent=11 // pred_check_branch
        %139 = sbr.rel (%p137) target = $region20
      $region19: #{downsample_forward.1} parent=11 // pred_region
        _
      $region20: #{downsample_forward.1} parent=11 // pred_fallthru
        _
    $region12: #{downsample_forward.1} parent=5 // pred_fallthru
      _
    %p140 = scmp.lt.s32.totalorder %s9, 2
    // Predicated region
    $region21: #{downsample_forward.1} parent=5 // pred_check
      %p141 = pneg %p140
    $region22: #{downsample_forward.1} parent=5 // pred_check_branch
      %143 = sbr.rel (%p141) target = $region24
    $region23: #{downsample_forward.1} parent=5 // pred_region
      // Predicated region
      $region25: #{downsample_forward.1} parent=23 // pred_check
        %p144 = pneg %p43
      $region26: #{downsample_forward.1} parent=23 // pred_check_branch
        %146 = sbr.rel (%p144) target = $region28
      $region27: #{downsample_forward.1} parent=23 // pred_region
        %p147 = scmp.lt.s32.totalorder %s16, 1
        %s148 = scalar_select %p147, %s16, 1
        %p149 = scmp.lt.s32.totalorder %s17, 0
        %s150 = scalar_select %p149, %s17, 0
        %s151 = smul.addr %s150, 9
        %s152 = smul.addr %s148, 9
        %s153 = sadd.s32 %s151, %s152
        %s154 = smul.addr %s153, 4
        %s155 = scalar_lea.vmem %s0, %s154
      $region28: #{downsample_forward.1} parent=23 // pred_fallthru
        _
    $region24: #{downsample_forward.1} parent=5 // pred_fallthru
      _
    %p156 = scmp.le.s32.totalorder 1, %s9
    %p157 = scmp.lt.s32.totalorder %s9, 3
    %p158 = pnand %p156, %p157
    %p159 = pneg %p158
    // Predicated region
    $region29: #{downsample_forward.1} parent=5 // pred_check
      _
    $region30: #{downsample_forward.1} parent=5 // pred_check_branch
      %161 = sbr.rel (%p158) target = $region32
    $region31: #{downsample_forward.1} parent=5 // pred_region
      %s162 = ssub.s32 %s9, 1
      %p163 = scmp.lt.s32.totalorder %s18, 1
      %s164 = scalar_select %p163, %s18, 1
      %p165 = scmp.lt.s32.totalorder %s19, 0
      %s166 = scalar_select %p165, %s19, 0
      %s167 = smul.addr %s166, 9
      %s168 = smul.addr %s164, 9
      %s169 = sadd.s32 %s167, %s168
      %s170 = smul.addr %s169, 4
      %s171 = scalar_lea.vmem %s0, %s170
      %p172 = pneg %p49
      %p173 = pneg %p46
      %p174 = pneg %p70
      %p175 = pneg %p67
      %p176 = pneg %p91
      %p177 = pneg %p88
      %p178 = pneg %p119
      %p179 = pneg %p116
      %p180 = scmp.lt.s32.totalorder %s18, 1
      %s181 = scalar_select %p180, %s18, 1
      %p182 = scmp.lt.s32.totalorder %s19, 0
      %s183 = scalar_select %p182, %s19, 0
      %s184 = smul.addr %s183, 8
      %s185 = smul.addr %s181, 8
      %s186 = sadd.s32 %s184, %s185
      %s187 = smul.addr %s186, 8
      %s188 = scalar_lea.vmem %s3, %s187
      %p189 = scmp.lt.s32.totalorder %s18, 1
      %s190 = scalar_select %p189, %s18, 1
      %p191 = scmp.lt.s32.totalorder %s19, 0
      %s192 = scalar_select %p191, %s19, 0
      %s193 = smul.addr %s192, 9
      %s194 = smul.addr %s190, 9
      %s195 = sadd.s32 %s193, %s194
      %s196 = smul.addr %s195, 4
      %s197 = scalar_lea.vmem %s0, %s196
      %p198 = scmp.lt.s32.totalorder %s18, 1
      %s199 = scalar_select %p198, %s18, 1
      %p200 = scmp.lt.s32.totalorder %s19, 0
      %s201 = scalar_select %p200, %s19, 0
      %s202 = smul.addr %s201, 8
      %s203 = smul.addr %s199, 8
      %s204 = sadd.s32 %s202, %s203
      %s205 = smul.addr %s204, 8
      %s206 = scalar_lea.vmem %s3, %s205
      %v208 = vld [vmem:[%s197] sm:$0xf]
      %v209 = vld [vmem:[%s197 + $0x4] sm:$0xf]
      %v210 = vld [vmem:[%s197 + $0x8] sm:$0xf]
      %v211 = vld [vmem:[%s197 + $0xc] sm:$0xf]
      %v212 = vld [vmem:[%s197 + $0x10] sm:$0xf]
      %v213 = vld [vmem:[%s197 + $0x14] sm:$0xf]
      %v214 = vld [vmem:[%s197 + $0x18] sm:$0xf]
      %v215 = vld [vmem:[%s197 + $0x1c] sm:$0xf]
      %v216 = vld [vmem:[%s197 + $0x20] sm:$0xf]
      %v217 = vld [vmem:[%s1] sm:$0xf]
      %v218 = vld [vmem:[%s1 + $0x4] sm:$0xf]
      %v219 = vld [vmem:[%s1 + $0x8] sm:$0xf]
      %v220 = vld [vmem:[%s1 + $0xc] sm:$0xf]
      %s221 = scalar_lea.vmem %s1, 16
      %v222 = vld [vmem:[%s221] sm:$0xf]
      %v223 = vld [vmem:[%s221 + $0x4] sm:$0xf]
      %v224 = vld [vmem:[%s221 + $0x8] sm:$0xf]
      %v225 = vld [vmem:[%s221 + $0xc] sm:$0xf]
      %v234 = vunpack.c.l.b16 %v209
      %v235 = vunpack.c.l.b16 %v210
      %v236 = vunpack.c.l.b16 %v211
      %v237 = vunpack.c.l.b16 %v212
      %v238 = vunpack.c.l.b16 %v213
      %v239 = vunpack.c.l.b16 %v214
      %v240 = vunpack.c.l.b16 %v215
      %v241 = vunpack.c.l.b16 %v216
      %v242 = vpack.c.b16 %v235, %v234
      %v243 = vpack.c.b16 %v237, %v236
      %v244 = vpack.c.b16 %v239, %v238
      %v245 = vpack.c.b16 %v241, %v240
      %v250 = vunpack.c.l.b16 %v222
      %v251 = vunpack.c.l.b16 %v223
      %v252 = vunpack.c.l.b16 %v224
      %v253 = vunpack.c.l.b16 %v225
      %v254 = vpack.c.b16 %v251, %v250
      %v255 = vpack.c.b16 %v253, %v252
      %vm258 = vcmask 261120
      %v260 = vsel %vm258, %v242, 0
      %v263 = vsel %vm258, %v243, 0
      %v266 = vsel %vm258, %v244, 0
      %v269 = vsel %vm258, %v245, 0
      %271 = vmatprep.subr.bf16.mxu0 0
      %272 = vmatpush1.bf16.msra.mxu0 0
      %273 = vmatprep.subr.bf16.mxu0 0
      %274 = vmatpush1.bf16.msra.mxu0 0
      %275 = vmatprep.subr.bf16.mxu0 0
      %276 = vmatpush1.bf16.msra.mxu0 0
      %277 = vmatprep.subr.bf16.mxu0 0
      %278 = vmatpush1.bf16.msra.mxu0 0
      %279 = vmatprep.subr.bf16.mxu0 0
      %280 = vmatpush1.bf16.msra.mxu0 0
      %281 = vmatprep.subr.bf16.mxu0 0
      %282 = vmatpush1.bf16.msra.mxu0 0
      %283 = vmatprep.subr.bf16.mxu0 0
      %284 = vmatpush1.bf16.msra.mxu0 %v255
      %285 = vmatprep.subr.bf16.mxu0 0
      %286 = vmatpush1.bf16.msra.mxu0 %v254
      %287 = vmatprep.subr.bf16.mxu0 0
      %288 = vmatpush2.bf16.msra.mxu0 0
      %289 = vmatprep.subr.bf16.mxu0 0
      %290 = vmatpush2.bf16.msra.mxu0 0
      %291 = vmatprep.subr.bf16.mxu0 0
      %292 = vmatpush2.bf16.msra.mxu0 0
      %293 = vmatprep.subr.bf16.mxu0 0
      %294 = vmatpush2.bf16.msra.mxu0 0
      %295 = vmatprep.subr.bf16.mxu0 0
      %296 = vmatpush2.bf16.msra.mxu0 0
      %297 = vmatprep.subr.bf16.mxu0 0
      %298 = vmatpush2.bf16.msra.mxu0 0
      %299 = vmatprep.subr.bf16.mxu0 0
      %300 = vmatpush2.bf16.msra.mxu0 0
      %301 = vmatprep.subr.bf16.mxu0 0
      %302 = vmatpush2.bf16.msra.mxu0 0
      %303 = vmatprep.mubr.bf16.mxu0 0
      %304 = vmatmul.mubr.bf16.gmra.mxu0 %v260
      %v305 = vpop.f32.mrf.mxu0
      %v306 = vadd.f32 0.0, %v305
      %v307 = vpop.f32.mrf.mxu0
      %v308 = vpop.f32.mrf.mxu0
      %v309 = vadd.f32 0.0, %v308
      %v310 = vpop.f32.mrf.mxu0
      %311 = vmatprep.mubr.bf16.mxu0 0
      %312 = vmatmul.mubr.bf16.gmra.mxu0 %v263
      %v313 = vpop.f32.mrf.mxu0
      %v314 = vadd.f32 0.0, %v313
      %v315 = vpop.f32.mrf.mxu0
      %v316 = vpop.f32.mrf.mxu0
      %v317 = vadd.f32 0.0, %v316
      %v318 = vpop.f32.mrf.mxu0
      %319 = vmatprep.mubr.bf16.mxu0 0
      %320 = vmatmul.mubr.bf16.gmra.mxu0 %v266
      %v321 = vpop.f32.mrf.mxu0
      %v322 = vadd.f32 0.0, %v321
      %v323 = vpop.f32.mrf.mxu0
      %v324 = vpop.f32.mrf.mxu0
      %v325 = vadd.f32 0.0, %v324
      %v326 = vpop.f32.mrf.mxu0
      %327 = vmatprep.mubr.bf16.mxu0 0
      %328 = vmatmul.mubr.bf16.gmra.mxu0 %v269
      %v329 = vpop.f32.mrf.mxu0
      %v330 = vadd.f32 0.0, %v329
      %v331 = vpop.f32.mrf.mxu0
      %v332 = vpop.f32.mrf.mxu0
      %v333 = vadd.f32 0.0, %v332
      %v334 = vpop.f32.mrf.mxu0
      %335 = vdwg.mxu0
      %v337 = vunpack.c.l.b16 %v208
      %v338 = vpack.c.b16 %v234, %v337
      %v339 = vpack.c.b16 %v236, %v235
      %v340 = vpack.c.b16 %v238, %v237
      %v341 = vpack.c.b16 %v240, %v239
      %v346 = vunpack.c.l.b16 %v217
      %v347 = vunpack.c.l.b16 %v218
      %v348 = vunpack.c.l.b16 %v219
      %v349 = vunpack.c.l.b16 %v220
      %v350 = vpack.c.b16 %v347, %v346
      %v351 = vpack.c.b16 %v349, %v348
      %v355 = vsel %vm258, %v338, 0
      %v358 = vsel %vm258, %v339, 0
      %v361 = vsel %vm258, %v340, 0
      %v364 = vsel %vm258, %v341, 0
      %366 = vmatprep.subr.bf16.mxu0 0
      %367 = vmatpush1.bf16.msra.mxu0 0
      %368 = vmatprep.subr.bf16.mxu0 0
      %369 = vmatpush1.bf16.msra.mxu0 0
      %370 = vmatprep.subr.bf16.mxu0 0
      %371 = vmatpush1.bf16.msra.mxu0 0
      %372 = vmatprep.subr.bf16.mxu0 0
      %373 = vmatpush1.bf16.msra.mxu0 0
      %374 = vmatprep.subr.bf16.mxu0 0
      %375 = vmatpush1.bf16.msra.mxu0 0
      %376 = vmatprep.subr.bf16.mxu0 0
      %377 = vmatpush1.bf16.msra.mxu0 0
      %378 = vmatprep.subr.bf16.mxu0 0
      %379 = vmatpush1.bf16.msra.mxu0 %v351
      %380 = vmatprep.subr.bf16.mxu0 0
      %381 = vmatpush1.bf16.msra.mxu0 %v350
      %382 = vmatprep.subr.bf16.mxu0 0
      %383 = vmatpush2.bf16.msra.mxu0 0
      %384 = vmatprep.subr.bf16.mxu0 0
      %385 = vmatpush2.bf16.msra.mxu0 0
      %386 = vmatprep.subr.bf16.mxu0 0
      %387 = vmatpush2.bf16.msra.mxu0 0
      %388 = vmatprep.subr.bf16.mxu0 0
      %389 = vmatpush2.bf16.msra.mxu0 0
      %390 = vmatprep.subr.bf16.mxu0 0
      %391 = vmatpush2.bf16.msra.mxu0 0
      %392 = vmatprep.subr.bf16.mxu0 0
      %393 = vmatpush2.bf16.msra.mxu0 0
      %394 = vmatprep.subr.bf16.mxu0 0
      %395 = vmatpush2.bf16.msra.mxu0 0
      %396 = vmatprep.subr.bf16.mxu0 0
      %397 = vmatpush2.bf16.msra.mxu0 0
      %398 = vmatprep.mubr.bf16.mxu0 0
      %399 = vmatmul.mubr.bf16.gmra.mxu0 %v355
      %v400 = vpop.f32.mrf.mxu0
      %v401 = vadd.f32 %v306, %v400
      %v402 = vpop.f32.mrf.mxu0
      %v403 = vpop.f32.mrf.mxu0
      %v404 = vadd.f32 %v309, %v403
      %v405 = vpop.f32.mrf.mxu0
      %406 = vmatprep.mubr.bf16.mxu0 0
      %407 = vmatmul.mubr.bf16.gmra.mxu0 %v358
      %v408 = vpop.f32.mrf.mxu0
      %v409 = vadd.f32 %v314, %v408
      %v410 = vpop.f32.mrf.mxu0
      %v411 = vpop.f32.mrf.mxu0
      %v412 = vadd.f32 %v317, %v411
      %v413 = vpop.f32.mrf.mxu0
      %414 = vmatprep.mubr.bf16.mxu0 0
      %415 = vmatmul.mubr.bf16.gmra.mxu0 %v361
      %v416 = vpop.f32.mrf.mxu0
      %v417 = vadd.f32 %v322, %v416
      %v418 = vpop.f32.mrf.mxu0
      %v419 = vpop.f32.mrf.mxu0
      %v420 = vadd.f32 %v325, %v419
      %v421 = vpop.f32.mrf.mxu0
      %422 = vmatprep.mubr.bf16.mxu0 0
      %423 = vmatmul.mubr.bf16.gmra.mxu0 %v364
      %v424 = vpop.f32.mrf.mxu0
      %v425 = vadd.f32 %v330, %v424
      %v426 = vpop.f32.mrf.mxu0
      %v427 = vpop.f32.mrf.mxu0
      %v428 = vadd.f32 %v333, %v427
      %v429 = vpop.f32.mrf.mxu0
      %430 = vdwg.mxu0
      %v431 = vld [vmem:[%s2] sm:$0x1]
      %v433 = vlaneseq
      %v434 = vshrl.u32 %v433, 7
      %v435 = vsub.s32 0, %v434
      %v436 = vrot.slane %v431, %v435
      %v438 = vadd.f32 %v401, %v436
      %v439 = vadd.f32 %v404, %v436
      %v440 = vadd.f32 %v409, %v436
      %v441 = vadd.f32 %v412, %v436
      %v442 = vadd.f32 %v417, %v436
      %v443 = vadd.f32 %v420, %v436
      %v444 = vadd.f32 %v425, %v436
      %v445 = vadd.f32 %v428, %v436
      %vm446 = vcmask 31744
      %447 = vst.msk [vmem:[%s206] sm:$0xff] %vm446, %v438
      %448 = vst.msk [vmem:[%s206 + $0x8] sm:$0xff] %vm446, %v439
      %449 = vst.msk [vmem:[%s206 + $0x10] sm:$0xff] %vm446, %v440
      %450 = vst.msk [vmem:[%s206 + $0x18] sm:$0xff] %vm446, %v441
      %451 = vst.msk [vmem:[%s206 + $0x20] sm:$0xff] %vm446, %v442
      %452 = vst.msk [vmem:[%s206 + $0x28] sm:$0xff] %vm446, %v443
      %453 = vst.msk [vmem:[%s206 + $0x30] sm:$0xff] %vm446, %v444
      %454 = vst.msk [vmem:[%s206 + $0x38] sm:$0xff] %vm446, %v445
      %p455 = scmp.lt.s32.totalorder %s18, 1
      %s456 = scalar_select %p455, %s18, 1
      %p457 = scmp.lt.s32.totalorder %s19, 0
      %s458 = scalar_select %p457, %s19, 0
      %s459 = smul.addr %s458, 8
      %s460 = smul.addr %s456, 8
      %s461 = sadd.s32 %s459, %s460
      %s462 = smul.addr %s461, 8
      %s463 = scalar_lea.vmem %s3, %s462
      // Predicated region
      $region33: #{downsample_forward.1} parent=31 // pred_check
        %p464 = pneg %p116
      $region34: #{downsample_forward.1} parent=31 // pred_check_branch
        %466 = sbr.rel (%p464) target = $region36
      $region35: #{downsample_forward.1} parent=31 // pred_region
        _
      $region36: #{downsample_forward.1} parent=31 // pred_fallthru
        _
    $region32: #{downsample_forward.1} parent=5 // pred_fallthru
      _
    %p467 = scmp.le.s32.totalorder 2, %s9
    // Predicated region
    $region37: #{downsample_forward.1} parent=5 // pred_check
      %p468 = pneg %p467
    $region38: #{downsample_forward.1} parent=5 // pred_check_branch
      %470 = sbr.rel (%p468) target = $region40
    $region39: #{downsample_forward.1} parent=5 // pred_region
      %s471 = ssub.s32 %s9, 2
      // Predicated region
      $region41: #{downsample_forward.1} parent=39 // pred_check
        %p472 = pneg %p122
      $region42: #{downsample_forward.1} parent=39 // pred_check_branch
        %474 = sbr.rel (%p472) target = $region44
      $region43: #{downsample_forward.1} parent=39 // pred_region
        %p475 = scmp.lt.s32.totalorder %s20, 1
        %s476 = scalar_select %p475, %s20, 1
        %p477 = scmp.lt.s32.totalorder %s21, 0
        %s478 = scalar_select %p477, %s21, 0
        %s479 = smul.addr %s478, 8
        %s480 = smul.addr %s476, 8
        %s481 = sadd.s32 %s479, %s480
        %s482 = smul.addr %s481, 8
        %s483 = scalar_lea.vmem %s3, %s482
      $region44: #{downsample_forward.1} parent=39 // pred_fallthru
        _
    $region40: #{downsample_forward.1} parent=5 // pred_fallthru
      _
  $region6: #{downsample_forward.1} parent=0 // loop_footer
    %s13 = sadd.s32 1, %s9
  $region7: #{downsample_forward.1} parent=0 // loop_footer_branch
    %8 = sbr.rel target = $region3
  $region8: #{downsample_forward.1} parent=0 // loop_exit
    _

</llo_original>
